<compile_context>
chip_gen: v5e
topology: v5e:2x2
jax: 0.10.0
libtpu: 0.0.40
codegen_flags: <defaults>
</compile_context>

<pallas_src>
import jax
import jax.numpy as jnp
from jax.experimental import pallas as pl
from jax.experimental.pallas import tpu as pltpu

F = 16        # GraphConv(16, 16)
_LANE = 128


# ---------------------------------------------------------------------------
# Path A: resident-adjacency, fused-layer kernel (small / medium graphs).
# ---------------------------------------------------------------------------
def _fused_layers_kernel(a_ref, x0_ref, wrel_ref, wroot_ref, b_ref, o_ref):
    """grid = (num_layers,).  A^T, x-carry and the output are VMEM-resident.

    a_ref    : (Np, Np) bf16  A^T, A^T[src, dst] = sum of edge weights src->dst
    x0_ref   : (F, Np)  f32   input features, transposed
    wrel_ref : (1, F, F) f32  lin_rel weight of this layer
    wroot_ref: (1, F, F) f32  lin_root weight of this layer
    b_ref    : (1, F, 1) f32  lin_rel bias (column) of this layer
    o_ref    : (F, Np)  f32   carries x between layers (same block every step)
    """
    layer = pl.program_id(0)

    @pl.when(layer == 0)
    def _():
        o_ref[...] = x0_ref[...]

    x = o_ref[...]                                             # (F, Np) f32
    # agg_T = x_T @ A^T  == (A @ x)^T ; bf16 operands, f32 accumulation.
    agg = jnp.dot(x.astype(jnp.bfloat16), a_ref[...],
                  preferred_element_type=jnp.float32)          # (F, Np)
    out = jnp.dot(wrel_ref[0], agg, preferred_element_type=jnp.float32)
    out += jnp.dot(wroot_ref[0], x, preferred_element_type=jnp.float32)
    out += b_ref[0]                                            # (F,1) broadcast
    o_ref[...] = out


def _gnn_fused(x_t, adj_t, w_rel, w_root, b_col):
    f, n_pad = x_t.shape
    num_layers = w_rel.shape[0]
    return pl.pallas_call(
        _fused_layers_kernel,
        out_shape=jax.ShapeDtypeStruct((f, n_pad), jnp.float32),
        grid_spec=pltpu.PrefetchScalarGridSpec(
            num_scalar_prefetch=0,
            grid=(num_layers,),
            in_specs=[
                pl.BlockSpec((n_pad, n_pad), lambda l: (0, 0)),  # A^T (resident)
                pl.BlockSpec((f, n_pad), lambda l: (0, 0)),      # x0
                pl.BlockSpec((1, f, f), lambda l: (l, 0, 0)),    # W_rel[l]
                pl.BlockSpec((1, f, f), lambda l: (l, 0, 0)),    # W_root[l]
                pl.BlockSpec((1, f, 1), lambda l: (l, 0, 0)),    # b[l]
            ],
            out_specs=pl.BlockSpec((f, n_pad), lambda l: (0, 0)),
        ),
        compiler_params=pltpu.CompilerParams(
            dimension_semantics=("arbitrary",),
            vmem_limit_bytes=32 << 20),
    )(adj_t, x_t, w_rel, w_root, b_col)


# ---------------------------------------------------------------------------
# Path B: tiled single-layer kernel (adjacency streamed from HBM).
# ---------------------------------------------------------------------------
def _graphconv_tiled_kernel(a_ref, xk_ref, xi_ref, wrel_ref, wroot_ref, b_ref,
                            o_ref):
    """One (i, k) grid step.  i = dst row tile (parallel), k = src tile (red.).

    a_ref  : (TK, TM) bf16  A^T tile
    xk_ref : (F, TK)  bf16  source-node feature columns (aggregation operand)
    xi_ref : (F, TM)  f32   destination-node feature columns (root term)
    wrel_ref/wroot_ref : (F, F) f32
    b_ref  : (F, 1)   f32
    o_ref  : (F, TM)  f32   output block; also serves as the k-accumulator
                            (its block index is independent of k -> resident).
    """
    k = pl.program_id(1)
    part = jnp.dot(xk_ref[...], a_ref[...], preferred_element_type=jnp.float32)

    @pl.when(k == 0)
    def _():
        o_ref[...] = part

    @pl.when(k > 0)
    def _():
        o_ref[...] += part

    @pl.when(k == pl.num_programs(1) - 1)
    def _():
        agg = o_ref[...]
        out = jnp.dot(wrel_ref[...], agg, preferred_element_type=jnp.float32)
        out += jnp.dot(wroot_ref[...], xi_ref[...],
                       preferred_element_type=jnp.float32)
        out += b_ref[...]                                      # (F,1) broadcast
        o_ref[...] = out


def _graph_conv_tiled(x_t, x_bf16, adj_t, w_rel, w_root, b_col, *, tm, tk):
    f, n_pad = x_t.shape
    grid = (n_pad // tm, n_pad // tk)
    # Double-buffered tile footprint; raise the scoped VMEM limit only if the
    # tiles are big enough to exceed v5e's 16 MiB default.
    vmem_need = 2 * (tk * tm * 2 + f * tk * 2 + 2 * f * tm * 4) + (1 << 20)
    cp = dict(dimension_semantics=("parallel", "arbitrary"))
    if vmem_need > (16 << 20):
        cp["vmem_limit_bytes"] = min(48 << 20, 2 * vmem_need)
    return pl.pallas_call(
        _graphconv_tiled_kernel,
        out_shape=jax.ShapeDtypeStruct((f, n_pad), jnp.float32),
        grid_spec=pltpu.PrefetchScalarGridSpec(
            num_scalar_prefetch=0,
            grid=grid,
            in_specs=[
                pl.BlockSpec((tk, tm), lambda i, k: (k, i)),   # A^T tile (bf16)
                pl.BlockSpec((f, tk), lambda i, k: (0, k)),    # x_T src (bf16)
                pl.BlockSpec((f, tm), lambda i, k: (0, i)),    # x_T dst (f32)
                pl.BlockSpec((f, f), lambda i, k: (0, 0)),     # W_rel
                pl.BlockSpec((f, f), lambda i, k: (0, 0)),     # W_root
                pl.BlockSpec((f, 1), lambda i, k: (0, 0)),     # bias column
            ],
            out_specs=pl.BlockSpec((f, tm), lambda i, k: (0, i)),
        ),
        compiler_params=pltpu.CompilerParams(**cp),
    )(adj_t, x_bf16, x_t, w_rel, w_root, b_col)


# ---------------------------------------------------------------------------
# Forward pass.
# ---------------------------------------------------------------------------
def gnn_forward(x, edge_index, edge_weight, params,
                num_sampled_nodes=None, num_sampled_edges=None,
                *, tile=512, tk=None, force_tiled=False, fused_max_nodes=2048):
    n, f = x.shape
    src, dst = edge_index[0], edge_index[1]

    use_fused = not force_tiled
    if use_fused:
        n_pad = max(_LANE, ((n + _LANE - 1) // _LANE) * _LANE)
        use_fused = n_pad <= fused_max_nodes      # A^T (bf16) <= 8 MiB resident
    if not use_fused:
        assert tile % 256 == 0, "tile must be a multiple of 256"
        n_pad = ((n + tile - 1) // tile) * tile

    # Dense A^T (A^T[src, dst] = sum of edge weights src->dst); f32 scatter,
    # single cast to bf16 (halves the dominant HBM stream).  Padded rows/cols
    # are exactly zero, so padded nodes never contribute to real nodes.
    adj_t = jnp.zeros((n_pad, n_pad), jnp.float32).at[src, dst].add(
        edge_weight.astype(jnp.float32)).astype(jnp.bfloat16)

    # Transposed, zero-padded features: x_T [F, Np] keeps N on the lane axis.
    x_t = jnp.zeros((f, n_pad), jnp.float32).at[:, :n].set(
        x.T.astype(jnp.float32))

    if use_fused:
        w_rel = jnp.stack([p[0] for p in params]).astype(jnp.float32)    # (L,F,F)
        w_root = jnp.stack([p[2] for p in params]).astype(jnp.float32)   # (L,F,F)
        b_col = jnp.stack([p[1].reshape(f, 1) for p in params]).astype(
            jnp.float32)                                                 # (L,F,1)
        out_t = _gnn_fused(x_t, adj_t, w_rel, w_root, b_col)
    else:
        tk = tile if tk is None else tk
        # Guarantee >= 2 dst row tiles so the "parallel" axis feeds both v7x TCs.
        tm = tile if (n_pad // tile) >= 2 else tile // 2
        assert n_pad % tm == 0 and n_pad % tk == 0 and tk % _LANE == 0
        out_t = x_t
        for (w_rel, b_rel, w_root) in params:
            out_t = _graph_conv_tiled(
                out_t, out_t.astype(jnp.bfloat16), adj_t,
                w_rel.astype(jnp.float32), w_root.astype(jnp.float32),
                b_rel.reshape(f, 1).astype(jnp.float32), tm=tm, tk=tk)

    return out_t[:, :n].T.astype(x.dtype)


def init_params(key, num_layers, f=F):
    params = []
    for _ in range(num_layers):
        k1, k2, k3, key = jax.random.split(key, 4)
        scale = 1.0 / jnp.sqrt(f)
        w_rel = jax.random.uniform(k1, (f, f), jnp.float32, -scale, scale)
        w_root = jax.random.uniform(k2, (f, f), jnp.float32, -scale, scale)
        b_rel = jax.random.uniform(k3, (f,), jnp.float32, -scale, scale)
        params.append((w_rel, b_rel, w_root))
    return params


if __name__ == "__main__":
    key = jax.random.PRNGKey(0)
    kx, ke, kw, kp = jax.random.split(key, 4)
    num_nodes, num_edges, num_layers = 200, 600, 3

    x = jax.random.normal(kx, (num_nodes, F), jnp.float32)
    edge_index = jax.random.randint(ke, (2, num_edges), 0, num_nodes,
                                    dtype=jnp.int32)
    edge_weight = jax.random.uniform(kw, (num_edges,), jnp.float32)
    params = init_params(kp, num_layers)

    # Path A: resident-adjacency fused-layer kernel (default for small graphs).
    out_fused = jax.block_until_ready(
        gnn_forward(x, edge_index, edge_weight, params))

    # Path B: tiled kernel (kept exercised; tk < tile also covers the
    # k-reduction accumulation branch).
    out_tiled = jax.block_until_ready(
        gnn_forward(x, edge_index, edge_weight, params,
                    force_tiled=True, tile=512, tk=256))

    # Plain-JAX reference, mirroring the kernels' bf16 aggregation operands
    # (same bf16 quantization point of A and x, f32 accumulation).  Note: a
    # true fp32 PyTorch run will differ by ~1e-2-level rounding by design.
    src, dst = edge_index[0], edge_index[1]
    adj = jnp.zeros((num_nodes, num_nodes), jnp.float32).at[dst, src].add(
        edge_weight)
    adj_bf16 = adj.astype(jnp.bfloat16)
    ref = x
    for (w_rel, b_rel, w_root) in params:
        agg = jnp.dot(adj_bf16, ref.astype(jnp.bfloat16),
                      preferred_element_type=jnp.float32)
        ref = agg @ w_rel.T + b_rel + ref @ w_root.T

    assert out_fused.shape == (num_nodes, F)
    assert jnp.allclose(out_fused, ref, atol=1e-2, rtol=1e-2), \
        float(jnp.abs(out_fused - ref).max())
    assert jnp.allclose(out_tiled, ref, atol=1e-2, rtol=1e-2), \
        float(jnp.abs(out_tiled - ref).max())

    print("KERNEL_OK")
</pallas_src>

<mosaic_0001>
module attributes {stable_mosaic.version = 11 : i64} {
  func.func @_fused_layers_kernel(%arg0: i32, %arg1: memref<256x256xbf16, #tpu.memory_space<vmem>>, %arg2: memref<16x256xf32, #tpu.memory_space<vmem>>, %arg3: memref<1x16x16xf32, #tpu.memory_space<vmem>>, %arg4: memref<1x16x16xf32, #tpu.memory_space<vmem>>, %arg5: memref<1x16x1xf32, #tpu.memory_space<vmem>>, %arg6: memref<16x256xf32, #tpu.memory_space<vmem>>) attributes {dimension_semantics = [#tpu.dimension_semantics<arbitrary>], iteration_bounds = array<i64: 3>, scalar_prefetch = 0 : i64, scratch_operands = 0 : i64, tpu.core_type = #tpu.core_type<tc>, window_params = [{pipeline_mode = #tpu.pipeline_mode<synchronous>, transform_indices = @transform_0, window_bounds = array<i64: 256, 256>}, {pipeline_mode = #tpu.pipeline_mode<synchronous>, transform_indices = @transform_1, window_bounds = array<i64: 16, 256>}, {transform_indices = @transform_2, window_bounds = array<i64: 1, 16, 16>}, {transform_indices = @transform_3, window_bounds = array<i64: 1, 16, 16>}, {transform_indices = @transform_4, window_bounds = array<i64: 1, 16, 1>}, {pipeline_mode = #tpu.pipeline_mode<synchronous>, transform_indices = @transform_5, window_bounds = array<i64: 16, 256>}]} {
    %c0_i32 = arith.constant 0 : i32
    %0 = arith.cmpi eq, %arg0, %c0_i32 : i32
    %1 = arith.extui %0 : i1 to i32
    %c0_i32_0 = arith.constant 0 : i32
    %2 = arith.cmpi ne, %1, %c0_i32_0 : i32
    scf.if %2 {
      %c0_17 = arith.constant 0 : index
      %c0_18 = arith.constant 0 : index
      %19 = vector.load %arg2[%c0_17, %c0_18] : memref<16x256xf32, #tpu.memory_space<vmem>>, vector<16x256xf32>
      %c0_19 = arith.constant 0 : index
      %c0_20 = arith.constant 0 : index
      %20 = vector.load %arg6[%c0_19, %c0_20] : memref<16x256xf32, #tpu.memory_space<vmem>>, vector<16x256xf32>
      tpu.vector_store %arg6[%c0_19, %c0_20], %19 {strides = array<i32>} : memref<16x256xf32, #tpu.memory_space<vmem>>, vector<16x256xf32>,
    } else {
    }
    %c0 = arith.constant 0 : index
    %c0_1 = arith.constant 0 : index
    %3 = vector.load %arg6[%c0, %c0_1] : memref<16x256xf32, #tpu.memory_space<vmem>>, vector<16x256xf32>
    %4 = arith.truncf %3 : vector<16x256xf32> to vector<16x256xbf16>
    %c0_2 = arith.constant 0 : index
    %c0_3 = arith.constant 0 : index
    %5 = vector.load %arg1[%c0_2, %c0_3] : memref<256x256xbf16, #tpu.memory_space<vmem>>, vector<256x256xbf16>
    %cst = arith.constant dense<0.000000e+00> : vector<16x256xf32>
    %6 = tpu.matmul %4, %5, %cst {dimension_numbers = #tpu.dot_dimension_numbers<[1], [0], [0], [1], [0, 0, 1, 1], [], []>} : vector<16x256xbf16>, vector<256x256xbf16>, vector<16x256xf32> -> vector<16x256xf32>
    %c0_4 = arith.constant 0 : index
    %c0_5 = arith.constant 0 : index
    %c0_6 = arith.constant 0 : index
    %7 = vector.load %arg3[%c0_4, %c0_5, %c0_6] : memref<1x16x16xf32, #tpu.memory_space<vmem>>, vector<1x16x16xf32>
    %8 = vector.shape_cast %7 : vector<1x16x16xf32> to vector<16x16xf32>
    %cst_7 = arith.constant dense<0.000000e+00> : vector<16x256xf32>
    %9 = tpu.matmul %8, %6, %cst_7 {dimension_numbers = #tpu.dot_dimension_numbers<[1], [0], [0], [1], [0, 0, 1, 1], [], []>} : vector<16x16xf32>, vector<16x256xf32>, vector<16x256xf32> -> vector<16x256xf32>
    %c0_8 = arith.constant 0 : index
    %c0_9 = arith.constant 0 : index
    %c0_10 = arith.constant 0 : index
    %10 = vector.load %arg4[%c0_8, %c0_9, %c0_10] : memref<1x16x16xf32, #tpu.memory_space<vmem>>, vector<1x16x16xf32>
    %11 = vector.shape_cast %10 : vector<1x16x16xf32> to vector<16x16xf32>
    %cst_11 = arith.constant dense<0.000000e+00> : vector<16x256xf32>
    %12 = tpu.matmul %11, %3, %cst_11 {dimension_numbers = #tpu.dot_dimension_numbers<[1], [0], [0], [1], [0, 0, 1, 1], [], []>} : vector<16x16xf32>, vector<16x256xf32>, vector<16x256xf32> -> vector<16x256xf32>
    %13 = arith.addf %9, %12 : vector<16x256xf32>
    %c0_12 = arith.constant 0 : index
    %c0_13 = arith.constant 0 : index
    %c0_14 = arith.constant 0 : index
    %14 = vector.load %arg5[%c0_12, %c0_13, %c0_14] : memref<1x16x1xf32, #tpu.memory_space<vmem>>, vector<1x16x1xf32>
    %15 = vector.shape_cast %14 : vector<1x16x1xf32> to vector<16x1xf32>
    %16 = vector.broadcast %15 : vector<16x1xf32> to vector<16x256xf32>
    %17 = arith.addf %13, %16 : vector<16x256xf32>
    %c0_15 = arith.constant 0 : index
    %c0_16 = arith.constant 0 : index
    %18 = vector.load %arg6[%c0_15, %c0_16] : memref<16x256xf32, #tpu.memory_space<vmem>>, vector<16x256xf32>
    tpu.vector_store %arg6[%c0_15, %c0_16], %17 {strides = array<i32>} : memref<16x256xf32, #tpu.memory_space<vmem>>, vector<16x256xf32>,
    return
  }
  func.func @transform_0(%arg0: i32) -> (i32, i32) {
    %c0_i32 = arith.constant 0 : i32
    %c0_i32_0 = arith.constant 0 : i32
    %c0_i32_1 = arith.constant 0 : i32
    return %c0_i32, %c0_i32_0 : i32, i32
  }
  func.func @transform_1(%arg0: i32) -> (i32, i32) {
    %c0_i32 = arith.constant 0 : i32
    %c0_i32_0 = arith.constant 0 : i32
    %c0_i32_1 = arith.constant 0 : i32
    return %c0_i32, %c0_i32_0 : i32, i32
  }
  func.func @transform_2(%arg0: i32) -> (i32, i32, i32) {
    %c0_i32 = arith.constant 0 : i32
    %c0_i32_0 = arith.constant 0 : i32
    %c0_i32_1 = arith.constant 0 : i32
    return %arg0, %c0_i32, %c0_i32_0 : i32, i32, i32
  }
  func.func @transform_3(%arg0: i32) -> (i32, i32, i32) {
    %c0_i32 = arith.constant 0 : i32
    %c0_i32_0 = arith.constant 0 : i32
    %c0_i32_1 = arith.constant 0 : i32
    return %arg0, %c0_i32, %c0_i32_0 : i32, i32, i32
  }
  func.func @transform_4(%arg0: i32) -> (i32, i32, i32) {
    %c0_i32 = arith.constant 0 : i32
    %c0_i32_0 = arith.constant 0 : i32
    %c0_i32_1 = arith.constant 0 : i32
    return %arg0, %c0_i32, %c0_i32_0 : i32, i32, i32
  }
  func.func @transform_5(%arg0: i32) -> (i32, i32) {
    %c0_i32 = arith.constant 0 : i32
    %c0_i32_0 = arith.constant 0 : i32
    %c0_i32_1 = arith.constant 0 : i32
    return %c0_i32, %c0_i32_0 : i32, i32
  }
}

</mosaic_0001>

<llo_original>
// kernel: tpu_custom_call.1
$region0: #{tpu_custom_call.1}
  #allocation0 [shape = 'u32[]', space=smem, size = 0x4, offset = 0x4, fixed_abs, tag = 'smem constant byte address 0x4 - core index']
  #allocation1 [shape = 'u32[72,128]{1,0:T(1,128)}', space=vmem, size = 0x9000, scoped, tag = 'internal scratch']
  %s0 = inlined_call_operand.hbm [shape: bf16[256,256], index: 0, kind: input, shape index: {}]
  %s1 = inlined_call_operand.hbm [shape: f32[16,256], index: 1, kind: input, shape index: {}]
  %s2 = inlined_call_operand.vmem [shape: f32[3,16,16], index: 2, kind: input, shape index: {}]
  %s3 = inlined_call_operand.hbm [shape: f32[3,16,16], index: 3, kind: input, shape index: {}]
  %s4 = inlined_call_operand.vmem [shape: f32[3,16,1], index: 4, kind: input, shape index: {}]
  %s5 = inlined_call_operand.hbm [shape: f32[16,256], index: 5, kind: output, shape index: {}]
  %s6 = sld [smem:[#allocation0]]
  $region69: #{tpu_custom_call.1} parent=0
    _
  %s8 = ssub.s32 1, %s6
  %s9 = scalar_select 0, %s8, %s6
  $region1: #{tpu_custom_call.1} parent=0
    #allocation2 [shape = 'u8[131072]{0}', space=vmem, size = 0x20000, scoped, tag = 'input window, operand 0, single buffered']
    #allocation3 [shape = 's32[2]{0}', space=sflag, size = 0x8, scoped, tag = 'scoped memory for tpu_custom_call.1']
    #allocation4 [shape = 's32[2]{0}', space=sflag, size = 0x8, scoped, tag = 'scoped memory for tpu_custom_call.1']
    #allocation5 [shape = 'u8[16384]{0}', space=vmem, size = 0x4000, scoped, tag = 'input window, operand 1, single buffered']
    #allocation6 [shape = 's32[1]{0}', space=sflag, size = 0x4, scoped, tag = 'scoped memory for tpu_custom_call.1']
    #allocation7 [shape = 'u8[16384]{0}', space=vmem, size = 0x4000, scoped, tag = 'input window, operand 3']
    #allocation8 [shape = 'u8[16384]{0}', space=vmem, size = 0x4000, scoped, tag = 'output window, operand 0, single buffered']
    %10 = vsyncpa [#allocation3], 0
    %11 = vsyncpa [#allocation6], 0
    %12 = vsyncpa [#allocation4], 0
    loop: start=0, step=1, limit=5
    $region2: #{tpu_custom_call.1} parent=1 // loop_pre_header
      _
    $region3: #{tpu_custom_call.1} parent=1 // loop_header
      %s14 = sphi 0, %s18
      %p15 = scmp.ge.s32.totalorder %s14, 5
      %s22 = sphi 0, %s22
      %s24 = sphi 0, %s22
      %s25 = sphi 0, %s24
      %s39 = sphi 0, %s25
      %s43 = sphi 0, %s43
      %s45 = sphi 0, %s43
      %s46 = sphi 0, %s45
      %s60 = sphi 0, %s46
      %s66 = sphi 0, %s68
      %s69 = sphi 0, %s66
      %s70 = sphi 0, %s69
      %s86 = sphi 0, %s70
      %s92 = sphi 0, %s94
      %s95 = sphi 0, %s92
      %s96 = sphi 0, %s95
      %s112 = sphi 0, %s96
      %s118 = sphi 0, %s120
      %s121 = sphi 0, %s118
      %s122 = sphi 0, %s121
      %s138 = sphi 0, %s122
      %s142 = sphi 0, %s142
      %s144 = sphi 0, %s142
      %s145 = sphi 0, %s144
      %s159 = sphi 0, %s145
    $region4: #{tpu_custom_call.1} parent=1 // loop_header_branch
      %17 = sbr.rel (%p15) target = $region8
    $region5: #{tpu_custom_call.1} parent=1 // loop_body
      %s19 = ssub.s32 %s14, 1
      %s20 = ssub.s32 %s14, 2
      %s21 = sadd.s32 %s14, 1
      %s23 = sadd.s32 %s22, 1
      %p26 = scmp.eq.s32.totalorder %s14, 2
      %p27 = scmp.ne.s32.totalorder %s22, %s24
      %p28 = scmp.eq.s32.totalorder %s14, 0
      %p29 = por %p27, %p28
      %p30 = scmp.ne.s32.totalorder %s22, %s24
      %p31 = scmp.eq.s32.totalorder %s19, 2
      %p32 = por %p30, %p31
      %p33 = scmp.ne.s32.totalorder %s24, %s25
      %p34 = scmp.eq.s32.totalorder %s19, 0
      %p35 = por %p33, %p34
      %p36 = scmp.ne.s32.totalorder %s24, %s25
      %p37 = scmp.eq.s32.totalorder %s20, 2
      %p38 = por %p36, %p37
      %p40 = scmp.ne.s32.totalorder %s25, %s39
      %p41 = scmp.eq.s32.totalorder %s20, 0
      %p42 = por %p40, %p41
      %s44 = sadd.s32 %s43, 1
      %p47 = scmp.eq.s32.totalorder %s14, 2
      %p48 = scmp.ne.s32.totalorder %s43, %s45
      %p49 = scmp.eq.s32.totalorder %s14, 0
      %p50 = por %p48, %p49
      %p51 = scmp.ne.s32.totalorder %s43, %s45
      %p52 = scmp.eq.s32.totalorder %s19, 2
      %p53 = por %p51, %p52
      %p54 = scmp.ne.s32.totalorder %s45, %s46
      %p55 = scmp.eq.s32.totalorder %s19, 0
      %p56 = por %p54, %p55
      %p57 = scmp.ne.s32.totalorder %s45, %s46
      %p58 = scmp.eq.s32.totalorder %s20, 2
      %p59 = por %p57, %p58
      %p61 = scmp.ne.s32.totalorder %s46, %s60
      %p62 = scmp.eq.s32.totalorder %s20, 0
      %p63 = por %p61, %p62
      %s64 = ssub.s32 %s14, %s21
      %p65 = scmp.eq.s32.totalorder %s64, 0
      %s67 = sadd.s32 %s66, 1
      %s68 = scalar_select %p65, %s66, %s67
      %p71 = pneg %p65
      %p72 = scmp.eq.s32.totalorder %s14, 2
      %p73 = por %p71, %p72
      %p74 = scmp.ne.s32.totalorder %s66, %s69
      %p75 = scmp.eq.s32.totalorder %s14, 0
      %p76 = por %p74, %p75
      %p77 = scmp.ne.s32.totalorder %s66, %s69
      %p78 = scmp.eq.s32.totalorder %s19, 2
      %p79 = por %p77, %p78
      %p80 = scmp.ne.s32.totalorder %s69, %s70
      %p81 = scmp.eq.s32.totalorder %s19, 0
      %p82 = por %p80, %p81
      %p83 = scmp.ne.s32.totalorder %s69, %s70
      %p84 = scmp.eq.s32.totalorder %s20, 2
      %p85 = por %p83, %p84
      %p87 = scmp.ne.s32.totalorder %s70, %s86
      %p88 = scmp.eq.s32.totalorder %s20, 0
      %p89 = por %p87, %p88
      %s90 = ssub.s32 %s14, %s21
      %p91 = scmp.eq.s32.totalorder %s90, 0
      %s93 = sadd.s32 %s92, 1
      %s94 = scalar_select %p91, %s92, %s93
      %p97 = pneg %p91
      %p98 = scmp.eq.s32.totalorder %s14, 2
      %p99 = por %p97, %p98
      %p100 = scmp.ne.s32.totalorder %s92, %s95
      %p101 = scmp.eq.s32.totalorder %s14, 0
      %p102 = por %p100, %p101
      %p103 = scmp.ne.s32.totalorder %s92, %s95
      %p104 = scmp.eq.s32.totalorder %s19, 2
      %p105 = por %p103, %p104
      %p106 = scmp.ne.s32.totalorder %s95, %s96
      %p107 = scmp.eq.s32.totalorder %s19, 0
      %p108 = por %p106, %p107
      %p109 = scmp.ne.s32.totalorder %s95, %s96
      %p110 = scmp.eq.s32.totalorder %s20, 2
      %p111 = por %p109, %p110
      %p113 = scmp.ne.s32.totalorder %s96, %s112
      %p114 = scmp.eq.s32.totalorder %s20, 0
      %p115 = por %p113, %p114
      %s116 = ssub.s32 %s14, %s21
      %p117 = scmp.eq.s32.totalorder %s116, 0
      %s119 = sadd.s32 %s118, 1
      %s120 = scalar_select %p117, %s118, %s119
      %p123 = pneg %p117
      %p124 = scmp.eq.s32.totalorder %s14, 2
      %p125 = por %p123, %p124
      %p126 = scmp.ne.s32.totalorder %s118, %s121
      %p127 = scmp.eq.s32.totalorder %s14, 0
      %p128 = por %p126, %p127
      %p129 = scmp.ne.s32.totalorder %s118, %s121
      %p130 = scmp.eq.s32.totalorder %s19, 2
      %p131 = por %p129, %p130
      %p132 = scmp.ne.s32.totalorder %s121, %s122
      %p133 = scmp.eq.s32.totalorder %s19, 0
      %p134 = por %p132, %p133
      %p135 = scmp.ne.s32.totalorder %s121, %s122
      %p136 = scmp.eq.s32.totalorder %s20, 2
      %p137 = por %p135, %p136
      %p139 = scmp.ne.s32.totalorder %s122, %s138
      %p140 = scmp.eq.s32.totalorder %s20, 0
      %p141 = por %p139, %p140
      %s143 = sadd.s32 %s142, 1
      %p146 = scmp.eq.s32.totalorder %s14, 2
      %p147 = scmp.ne.s32.totalorder %s142, %s144
      %p148 = scmp.eq.s32.totalorder %s14, 0
      %p149 = por %p147, %p148
      %p150 = scmp.ne.s32.totalorder %s142, %s144
      %p151 = scmp.eq.s32.totalorder %s19, 2
      %p152 = por %p150, %p151
      %p153 = scmp.ne.s32.totalorder %s144, %s145
      %p154 = scmp.eq.s32.totalorder %s19, 0
      %p155 = por %p153, %p154
      %p156 = scmp.ne.s32.totalorder %s144, %s145
      %p157 = scmp.eq.s32.totalorder %s20, 2
      %p158 = por %p156, %p157
      %p160 = scmp.ne.s32.totalorder %s145, %s159
      %p161 = scmp.eq.s32.totalorder %s20, 0
      %p162 = por %p160, %p161
      %p163 = scmp.le.s32.totalorder 1, %s14
      %p164 = scmp.lt.s32.totalorder %s14, 4
      %p165 = pnand %p163, %p164
      %p166 = pneg %p165
      // Predicated region
      $region9: #{tpu_custom_call.1} parent=5 // pred_check
        _
      $region10: #{tpu_custom_call.1} parent=5 // pred_check_branch
        %168 = sbr.rel (%p165) target = $region12
      $region11: #{tpu_custom_call.1} parent=5 // pred_region
        %s169 = ssub.s32 %s14, 1
        // Predicated region
        $region13: #{tpu_custom_call.1} parent=11 // pred_check
          %p170 = pneg %p35
        $region14: #{tpu_custom_call.1} parent=11 // pred_check_branch
          %172 = sbr.rel (%p170) target = $region16
        $region15: #{tpu_custom_call.1} parent=11 // pred_region
          %174 = vsyncadd [#allocation3], 0
          %s175 = sshll.u32 %s0, 4
          %s176 = int_to_ptr.hbm [resolvable:$true] %s175
          %s177 = sshll.u32 [#allocation2], 4
          %s178 = int_to_ptr.vmem [resolvable:$true] %s177
          %183 = dma.hbm_to_vmem [thread:$0]  %s176, 4096, %s178, [#allocation3], 128, 128, 8
        $region16: #{tpu_custom_call.1} parent=11 // pred_fallthru
          _
        // Predicated region
        $region17: #{tpu_custom_call.1} parent=11 // pred_check
          %p184 = pneg %p56
        $region18: #{tpu_custom_call.1} parent=11 // pred_check_branch
          %186 = sbr.rel (%p184) target = $region20
        $region19: #{tpu_custom_call.1} parent=11 // pred_region
          %188 = vsyncadd [#allocation6], 0
          %s189 = sshll.u32 %s1, 4
          %s190 = int_to_ptr.hbm [resolvable:$true] %s189
          %s191 = sshll.u32 [#allocation5], 4
          %s192 = int_to_ptr.vmem [resolvable:$true] %s191
          %197 = dma.hbm_to_vmem [thread:$0]  %s190, 512, %s192, [#allocation6], 256, 256, 16
        $region20: #{tpu_custom_call.1} parent=11 // pred_fallthru
          _
      $region12: #{tpu_custom_call.1} parent=5 // pred_fallthru
        _
      %p198 = scmp.lt.s32.totalorder %s14, 3
      // Predicated region
      $region21: #{tpu_custom_call.1} parent=5 // pred_check
        %p199 = pneg %p198
      $region22: #{tpu_custom_call.1} parent=5 // pred_check_branch
        %201 = sbr.rel (%p199) target = $region24
      $region23: #{tpu_custom_call.1} parent=5 // pred_region
        // Predicated region
        $region25: #{tpu_custom_call.1} parent=23 // pred_check
          %p202 = pneg %p76
        $region26: #{tpu_custom_call.1} parent=23 // pred_check_branch
          %204 = sbr.rel (%p202) target = $region28
        $region27: #{tpu_custom_call.1} parent=23 // pred_region
          %p205 = scmp.lt.s32.totalorder %s14, 2
          %s206 = scalar_select %p205, %s14, 2
          %s207 = smul.addr %s206, 2
          %s208 = smul.addr %s207, 8
          %s209 = scalar_lea.vmem %s2, %s208
        $region28: #{tpu_custom_call.1} parent=23 // pred_fallthru
          _
        // Predicated region
        $region29: #{tpu_custom_call.1} parent=23 // pred_check
          %p210 = pneg %p102
        $region30: #{tpu_custom_call.1} parent=23 // pred_check_branch
          %212 = sbr.rel (%p210) target = $region32
        $region31: #{tpu_custom_call.1} parent=23 // pred_region
          %s213 = sand.u32 %s14, 1
          %s214 = scalar_lea.sflag [#allocation3], %s213
          %s215 = sand.u32 %s92, 1
          %s216 = smul.addr %s215, 16
          %s217 = scalar_lea.vmem [#allocation7], %s216
          %219 = vsyncadd %s214, 0
          %s220 = smul.addr %s14, 2
          %s221 = smul.addr %s220, 8
          %s222 = scalar_lea.hbm %s3, %s221
          %s223 = sshll.u32 %s222, 4
          %s224 = int_to_ptr.hbm [resolvable:$true] %s223
          %s225 = sshll.u32 %s217, 4
          %s226 = int_to_ptr.vmem [resolvable:$true] %s225
          %231 = dma.hbm_to_vmem [thread:$0]  %s224, 256, %s226, %s214, 128, 128, 8
        $region32: #{tpu_custom_call.1} parent=23 // pred_fallthru
          _
        // Predicated region
        $region33: #{tpu_custom_call.1} parent=23 // pred_check
          %p232 = pneg %p128
        $region34: #{tpu_custom_call.1} parent=23 // pred_check_branch
          %234 = sbr.rel (%p232) target = $region36
        $region35: #{tpu_custom_call.1} parent=23 // pred_region
          %p235 = scmp.lt.s32.totalorder %s14, 2
          %s236 = scalar_select %p235, %s14, 2
          %s237 = smul.addr %s236, 2
          %s238 = smul.addr %s237, 8
          %s239 = scalar_lea.vmem %s4, %s238
        $region36: #{tpu_custom_call.1} parent=23 // pred_fallthru
          _
      $region24: #{tpu_custom_call.1} parent=5 // pred_fallthru
        _
      %p240 = scmp.le.s32.totalorder 1, %s14
      %p241 = scmp.lt.s32.totalorder %s14, 4
      %p242 = pnand %p240, %p241
      %p243 = pneg %p242
      // Predicated region
      $region37: #{tpu_custom_call.1} parent=5 // pred_check
        _
      $region38: #{tpu_custom_call.1} parent=5 // pred_check_branch
        %245 = sbr.rel (%p242) target = $region40
      $region39: #{tpu_custom_call.1} parent=5 // pred_region
        %s246 = ssub.s32 %s14, 1
        // Predicated region
        $region41: #{tpu_custom_call.1} parent=39 // pred_check
          %p247 = pneg %p35
        $region42: #{tpu_custom_call.1} parent=39 // pred_check_branch
          %249 = sbr.rel (%p247) target = $region44
        $region43: #{tpu_custom_call.1} parent=39 // pred_region
          %251 = dma.done [#allocation3], 4096
        $region44: #{tpu_custom_call.1} parent=39 // pred_fallthru
          _
        // Predicated region
        $region45: #{tpu_custom_call.1} parent=39 // pred_check
          %p252 = pneg %p56
        $region46: #{tpu_custom_call.1} parent=39 // pred_check_branch
          %254 = sbr.rel (%p252) target = $region48
        $region47: #{tpu_custom_call.1} parent=39 // pred_region
          %256 = dma.done [#allocation6], 512
        $region48: #{tpu_custom_call.1} parent=39 // pred_fallthru
          _
        %s257 = sand.u32 %s19, 1
        %s258 = scalar_lea.sflag [#allocation3], %s257
        %s259 = sand.u32 %s95, 1
        %s260 = smul.addr %s259, 16
        %s261 = scalar_lea.vmem [#allocation7], %s260
        // Predicated region
        $region49: #{tpu_custom_call.1} parent=39 // pred_check
          %p262 = pneg %p108
        $region50: #{tpu_custom_call.1} parent=39 // pred_check_branch
          %264 = sbr.rel (%p262) target = $region52
        $region51: #{tpu_custom_call.1} parent=39 // pred_region
          %266 = dma.done %s258, 256
        $region52: #{tpu_custom_call.1} parent=39 // pred_fallthru
          _
        %p267 = pneg %p35
        %p268 = pneg %p32
        %p269 = pneg %p56
        %p270 = pneg %p53
        %p271 = scmp.lt.s32.totalorder %s19, 2
        %s272 = scalar_select %p271, %s19, 2
        %s273 = smul.addr %s272, 2
        %s274 = smul.addr %s273, 8
        %s275 = scalar_lea.vmem %s2, %s274
        %p276 = pneg %p82
        %p277 = pneg %p79
        %s278 = sand.u32 %s19, 1
        %s279 = scalar_lea.sflag [#allocation3], %s278
        %s280 = sand.u32 %s95, 1
        %s281 = smul.addr %s280, 16
        %s282 = scalar_lea.vmem [#allocation7], %s281
        %p283 = pneg %p108
        %p284 = pneg %p105
        %p285 = scmp.lt.s32.totalorder %s19, 2
        %s286 = scalar_select %p285, %s19, 2
        %s287 = smul.addr %s286, 2
        %s288 = smul.addr %s287, 8
        %s289 = scalar_lea.vmem %s4, %s288
        %p290 = pneg %p134
        %p291 = pneg %p131
        %p292 = pneg %p155
        %p293 = pneg %p152
        %p294 = scmp.lt.s32.totalorder %s19, 2
        %s295 = scalar_select %p294, %s19, 2
        %s296 = smul.addr %s295, 2
        %s297 = smul.addr %s296, 8
        %s298 = scalar_lea.vmem %s2, %s297
        %p299 = scmp.lt.s32.totalorder %s19, 2
        %s300 = scalar_select %p299, %s19, 2
        %s301 = smul.addr %s300, 2
        %s302 = smul.addr %s301, 8
        %s303 = scalar_lea.vmem %s4, %s302
        %p304 = scmp.eq.s32.totalorder %s19, 0
        // Predicated region
        $region53: #{tpu_custom_call.1} parent=39 // pred_check
          %p305 = pneg %p304
        $region54: #{tpu_custom_call.1} parent=39 // pred_check_branch
          %307 = sbr.rel (%p305) target = $region56
        $region55: #{tpu_custom_call.1} parent=39 // pred_region
          %v308 = vld [vmem:[#allocation5] sm:$0xff]
          %v309 = vld [vmem:[#allocation5 + $0x8] sm:$0xff]
          %v310 = vld [vmem:[#allocation5 + $0x10] sm:$0xff]
          %v311 = vld [vmem:[#allocation5 + $0x18] sm:$0xff]
          %312 = vst [vmem:[#allocation8] sm:$0xff] %v308
          %313 = vst [vmem:[#allocation8 + $0x8] sm:$0xff] %v309
          %314 = vst [vmem:[#allocation8 + $0x10] sm:$0xff] %v310
          %315 = vst [vmem:[#allocation8 + $0x18] sm:$0xff] %v311
        $region56: #{tpu_custom_call.1} parent=39 // pred_fallthru
          _
        %v316 = vld [vmem:[#allocation8] sm:$0xff]
        %v317 = vld [vmem:[#allocation8 + $0x8] sm:$0xff]
        %v318 = vld [vmem:[#allocation8 + $0x10] sm:$0xff]
        %v319 = vld [vmem:[#allocation8 + $0x18] sm:$0xff]
        %v320 = vpack.c.bf16 %v318, %v316
        %v321 = vpack.c.bf16 %v319, %v317
        %v322 = vld [vmem:[#allocation2] sm:$0xff]
        %v323 = vld [vmem:[#allocation2 + $0x8] sm:$0xff]
        %v324 = vld [vmem:[#allocation2 + $0x10] sm:$0xff]
        %v325 = vld [vmem:[#allocation2 + $0x18] sm:$0xff]
        %v326 = vld [vmem:[#allocation2 + $0x20] sm:$0xff]
        %v327 = vld [vmem:[#allocation2 + $0x28] sm:$0xff]
        %v328 = vld [vmem:[#allocation2 + $0x30] sm:$0xff]
        %v329 = vld [vmem:[#allocation2 + $0x38] sm:$0xff]
        %v330 = vld [vmem:[#allocation2 + $0x40] sm:$0xff]
        %v331 = vld [vmem:[#allocation2 + $0x48] sm:$0xff]
        %v332 = vld [vmem:[#allocation2 + $0x50] sm:$0xff]
        %v333 = vld [vmem:[#allocation2 + $0x58] sm:$0xff]
        %v334 = vld [vmem:[#allocation2 + $0x60] sm:$0xff]
        %v335 = vld [vmem:[#allocation2 + $0x68] sm:$0xff]
        %v336 = vld [vmem:[#allocation2 + $0x70] sm:$0xff]
        %v337 = vld [vmem:[#allocation2 + $0x78] sm:$0xff]
        %v338 = vld [vmem:[#allocation2 + $0x80] sm:$0xff]
        %v339 = vld [vmem:[#allocation2 + $0x88] sm:$0xff]
        %v340 = vld [vmem:[#allocation2 + $0x90] sm:$0xff]
        %v341 = vld [vmem:[#allocation2 + $0x98] sm:$0xff]
        %v342 = vld [vmem:[#allocation2 + $0xa0] sm:$0xff]
        %v343 = vld [vmem:[#allocation2 + $0xa8] sm:$0xff]
        %v344 = vld [vmem:[#allocation2 + $0xb0] sm:$0xff]
        %v345 = vld [vmem:[#allocation2 + $0xb8] sm:$0xff]
        %v346 = vld [vmem:[#allocation2 + $0xc0] sm:$0xff]
        %v347 = vld [vmem:[#allocation2 + $0xc8] sm:$0xff]
        %v348 = vld [vmem:[#allocation2 + $0xd0] sm:$0xff]
        %v349 = vld [vmem:[#allocation2 + $0xd8] sm:$0xff]
        %v350 = vld [vmem:[#allocation2 + $0xe0] sm:$0xff]
        %v351 = vld [vmem:[#allocation2 + $0xe8] sm:$0xff]
        %v352 = vld [vmem:[#allocation2 + $0xf0] sm:$0xff]
        %v353 = vld [vmem:[#allocation2 + $0xf8] sm:$0xff]
        %v386 = vunpack.c.l.b16 %v322
        %v387 = vunpack.c.h.b16 %v322
        %v388 = vunpack.c.l.b16 %v323
        %v389 = vunpack.c.h.b16 %v323
        %v390 = vunpack.c.l.b16 %v324
        %v391 = vunpack.c.h.b16 %v324
        %v392 = vunpack.c.l.b16 %v325
        %v393 = vunpack.c.h.b16 %v325
        %v394 = vunpack.c.l.b16 %v326
        %v395 = vunpack.c.h.b16 %v326
        %v396 = vunpack.c.l.b16 %v327
        %v397 = vunpack.c.h.b16 %v327
        %v398 = vunpack.c.l.b16 %v328
        %v399 = vunpack.c.h.b16 %v328
        %v400 = vunpack.c.l.b16 %v329
        %v401 = vunpack.c.h.b16 %v329
        %v402 = vunpack.c.l.b16 %v330
        %v403 = vunpack.c.h.b16 %v330
        %v404 = vunpack.c.l.b16 %v331
        %v405 = vunpack.c.h.b16 %v331
        %v406 = vunpack.c.l.b16 %v332
        %v407 = vunpack.c.h.b16 %v332
        %v408 = vunpack.c.l.b16 %v333
        %v409 = vunpack.c.h.b16 %v333
        %v410 = vunpack.c.l.b16 %v334
        %v411 = vunpack.c.h.b16 %v334
        %v412 = vunpack.c.l.b16 %v335
        %v413 = vunpack.c.h.b16 %v335
        %v414 = vunpack.c.l.b16 %v336
        %v415 = vunpack.c.h.b16 %v336
        %v416 = vunpack.c.l.b16 %v337
        %v417 = vunpack.c.h.b16 %v337
        %v418 = vunpack.c.l.b16 %v338
        %v419 = vunpack.c.h.b16 %v338
        %v420 = vunpack.c.l.b16 %v339
        %v421 = vunpack.c.h.b16 %v339
        %v422 = vunpack.c.l.b16 %v340
        %v423 = vunpack.c.h.b16 %v340
        %v424 = vunpack.c.l.b16 %v341
        %v425 = vunpack.c.h.b16 %v341
        %v426 = vunpack.c.l.b16 %v342
        %v427 = vunpack.c.h.b16 %v342
        %v428 = vunpack.c.l.b16 %v343
        %v429 = vunpack.c.h.b16 %v343
        %v430 = vunpack.c.l.b16 %v344
        %v431 = vunpack.c.h.b16 %v344
        %v432 = vunpack.c.l.b16 %v345
        %v433 = vunpack.c.h.b16 %v345
        %v434 = vunpack.c.l.b16 %v346
        %v435 = vunpack.c.h.b16 %v346
        %v436 = vunpack.c.l.b16 %v347
        %v437 = vunpack.c.h.b16 %v347
        %v438 = vunpack.c.l.b16 %v348
        %v439 = vunpack.c.h.b16 %v348
        %v440 = vunpack.c.l.b16 %v349
        %v441 = vunpack.c.h.b16 %v349
        %v442 = vunpack.c.l.b16 %v350
        %v443 = vunpack.c.h.b16 %v350
        %v444 = vunpack.c.l.b16 %v351
        %v445 = vunpack.c.h.b16 %v351
        %v446 = vunpack.c.l.b16 %v352
        %v447 = vunpack.c.h.b16 %v352
        %v448 = vunpack.c.l.b16 %v353
        %v449 = vunpack.c.h.b16 %v353
        %v450 = vpack.c.b16 %v388, %v386
        %v451 = vpack.c.b16 %v389, %v387
        %v452 = vpack.c.b16 %v392, %v390
        %v453 = vpack.c.b16 %v393, %v391
        %v454 = vpack.c.b16 %v396, %v394
        %v455 = vpack.c.b16 %v397, %v395
        %v456 = vpack.c.b16 %v400, %v398
        %v457 = vpack.c.b16 %v401, %v399
        %v458 = vpack.c.b16 %v404, %v402
        %v459 = vpack.c.b16 %v405, %v403
        %v460 = vpack.c.b16 %v408, %v406
        %v461 = vpack.c.b16 %v409, %v407
        %v462 = vpack.c.b16 %v412, %v410
        %v463 = vpack.c.b16 %v413, %v411
        %v464 = vpack.c.b16 %v416, %v414
        %v465 = vpack.c.b16 %v417, %v415
        %v466 = vpack.c.b16 %v420, %v418
        %v467 = vpack.c.b16 %v421, %v419
        %v468 = vpack.c.b16 %v424, %v422
        %v469 = vpack.c.b16 %v425, %v423
        %v470 = vpack.c.b16 %v428, %v426
        %v471 = vpack.c.b16 %v429, %v427
        %v472 = vpack.c.b16 %v432, %v430
        %v473 = vpack.c.b16 %v433, %v431
        %v474 = vpack.c.b16 %v436, %v434
        %v475 = vpack.c.b16 %v437, %v435
        %v476 = vpack.c.b16 %v440, %v438
        %v477 = vpack.c.b16 %v441, %v439
        %v478 = vpack.c.b16 %v444, %v442
        %v479 = vpack.c.b16 %v445, %v443
        %v480 = vpack.c.b16 %v448, %v446
        %v481 = vpack.c.b16 %v449, %v447
        %514 = vmatpush.bf16.msra.mxu0 %v464
        %515 = vmatpush.bf16.msra.mxu0 %v462
        %516 = vmatpush.bf16.msra.mxu0 %v460
        %517 = vmatpush.bf16.msra.mxu0 %v458
        %518 = vmatpush.bf16.msra.mxu0 %v456
        %519 = vmatpush.bf16.msra.mxu0 %v454
        %520 = vmatpush.bf16.msra.mxu0 %v452
        %521 = vmatpush.bf16.msra.mxu0 %v450
        %522 = vmatmul.bf16.gmra.mxu0 %v320
        %v523 = vpop.f32.mrf.mxu0
        %v524 = vadd.f32 0.0, %v523
        %v525 = vpop.f32.mrf.mxu0
        %v526 = vadd.f32 0.0, %v525
        %527 = vdwg.mxu0
        %528 = vmatpush.bf16.msra.mxu0 %v480
        %529 = vmatpush.bf16.msra.mxu0 %v478
        %530 = vmatpush.bf16.msra.mxu0 %v476
        %531 = vmatpush.bf16.msra.mxu0 %v474
        %532 = vmatpush.bf16.msra.mxu0 %v472
        %533 = vmatpush.bf16.msra.mxu0 %v470
        %534 = vmatpush.bf16.msra.mxu0 %v468
        %535 = vmatpush.bf16.msra.mxu0 %v466
        %536 = vmatmul.bf16.gmra.mxu0 %v321
        %v537 = vpop.f32.mrf.mxu0
        %v538 = vadd.f32 %v524, %v537
        %v539 = vpop.f32.mrf.mxu0
        %v540 = vadd.f32 %v526, %v539
        %541 = vdwg.mxu0
        %542 = vmatpush.bf16.msra.mxu0 %v465
        %543 = vmatpush.bf16.msra.mxu0 %v463
        %544 = vmatpush.bf16.msra.mxu0 %v461
        %545 = vmatpush.bf16.msra.mxu0 %v459
        %546 = vmatpush.bf16.msra.mxu0 %v457
        %547 = vmatpush.bf16.msra.mxu0 %v455
        %548 = vmatpush.bf16.msra.mxu0 %v453
        %549 = vmatpush.bf16.msra.mxu0 %v451
        %550 = vmatmul.bf16.gmra.mxu0 %v320
        %v551 = vpop.f32.mrf.mxu0
        %v552 = vadd.f32 0.0, %v551
        %v553 = vpop.f32.mrf.mxu0
        %v554 = vadd.f32 0.0, %v553
        %555 = vdwg.mxu0
        %556 = vmatpush.bf16.msra.mxu0 %v481
        %557 = vmatpush.bf16.msra.mxu0 %v479
        %558 = vmatpush.bf16.msra.mxu0 %v477
        %559 = vmatpush.bf16.msra.mxu0 %v475
        %560 = vmatpush.bf16.msra.mxu0 %v473
        %561 = vmatpush.bf16.msra.mxu0 %v471
        %562 = vmatpush.bf16.msra.mxu0 %v469
        %563 = vmatpush.bf16.msra.mxu0 %v467
        %564 = vmatmul.bf16.gmra.mxu0 %v321
        %v565 = vpop.f32.mrf.mxu0
        %v566 = vadd.f32 %v552, %v565
        %v567 = vpop.f32.mrf.mxu0
        %v568 = vadd.f32 %v554, %v567
        %569 = vdwg.mxu0
        %v570 = vld [vmem:[%s298] sm:$0xff]
        %v571 = vld [vmem:[%s298 + $0x8] sm:$0xff]
        %v572 = vld [vmem:[%s261] sm:$0xff]
        %v573 = vld [vmem:[%s261 + $0x8] sm:$0xff]
        %vm574 = vcmask 130048
        %v576 = vsel %vm574, %v572, 0
        %v579 = vsel %vm574, %v573, 0
        %581 = vmatpush.msra.mxu0 0.0
        %582 = vmatpush.msra.mxu0 0.0
        %583 = vmatpush.msra.mxu0 0.0
        %584 = vmatpush.msra.mxu0 0.0
        %585 = vmatpush.msra.mxu0 0.0
        %586 = vmatpush.msra.mxu0 0.0
        %587 = vmatpush.msra.mxu0 0.0
        %588 = vmatpush.msra.mxu0 0.0
        %589 = vmatpush.msra.mxu0 0.0
        %590 = vmatpush.msra.mxu0 0.0
        %591 = vmatpush.msra.mxu0 0.0
        %592 = vmatpush.msra.mxu0 0.0
        %593 = vmatpush.msra.mxu0 0.0
        %594 = vmatpush.msra.mxu0 0.0
        %595 = vmatpush.msra.mxu0 %v318
        %596 = vmatpush.msra.mxu0 %v316
        %597 = vmatmul.f32.gmra.mxu0 %v576
        %v598 = vpop.f32.mrf.mxu0
        %v599 = vadd.f32 0.0, %v598
        %600 = vmatmul.f32.gmra.mxu0 %v579
        %v601 = vpop.f32.mrf.mxu0
        %v602 = vadd.f32 0.0, %v601
        %603 = vdwg.mxu0
        %604 = vmatpush.msra.mxu0 0.0
        %605 = vmatpush.msra.mxu0 0.0
        %606 = vmatpush.msra.mxu0 0.0
        %607 = vmatpush.msra.mxu0 0.0
        %608 = vmatpush.msra.mxu0 0.0
        %609 = vmatpush.msra.mxu0 0.0
        %610 = vmatpush.msra.mxu0 0.0
        %611 = vmatpush.msra.mxu0 0.0
        %612 = vmatpush.msra.mxu0 0.0
        %613 = vmatpush.msra.mxu0 0.0
        %614 = vmatpush.msra.mxu0 0.0
        %615 = vmatpush.msra.mxu0 0.0
        %616 = vmatpush.msra.mxu0 0.0
        %617 = vmatpush.msra.mxu0 0.0
        %618 = vmatpush.msra.mxu0 %v319
        %619 = vmatpush.msra.mxu0 %v317
        %620 = vmatmul.f32.gmra.mxu0 %v576
        %v621 = vpop.f32.mrf.mxu0
        %v622 = vadd.f32 0.0, %v621
        %623 = vmatmul.f32.gmra.mxu0 %v579
        %v624 = vpop.f32.mrf.mxu0
        %v625 = vadd.f32 0.0, %v624
        %626 = vdwg.mxu0
        %v628 = vsel %vm574, %v570, 0
        %v631 = vsel %vm574, %v571, 0
        %633 = vmatpush.msra.mxu0 0.0
        %634 = vmatpush.msra.mxu0 0.0
        %635 = vmatpush.msra.mxu0 0.0
        %636 = vmatpush.msra.mxu0 0.0
        %637 = vmatpush.msra.mxu0 0.0
        %638 = vmatpush.msra.mxu0 0.0
        %639 = vmatpush.msra.mxu0 0.0
        %640 = vmatpush.msra.mxu0 0.0
        %641 = vmatpush.msra.mxu0 0.0
        %642 = vmatpush.msra.mxu0 0.0
        %643 = vmatpush.msra.mxu0 0.0
        %644 = vmatpush.msra.mxu0 0.0
        %645 = vmatpush.msra.mxu0 0.0
        %646 = vmatpush.msra.mxu0 0.0
        %647 = vmatpush.msra.mxu0 %v540
        %648 = vmatpush.msra.mxu0 %v538
        %649 = vmatmul.f32.gmra.mxu0 %v628
        %v650 = vpop.f32.mrf.mxu0
        %v651 = vadd.f32 %v599, %v650
        %652 = vmatmul.f32.gmra.mxu0 %v631
        %v653 = vpop.f32.mrf.mxu0
        %v654 = vadd.f32 %v602, %v653
        %655 = vdwg.mxu0
        %656 = vmatpush.msra.mxu0 0.0
        %657 = vmatpush.msra.mxu0 0.0
        %658 = vmatpush.msra.mxu0 0.0
        %659 = vmatpush.msra.mxu0 0.0
        %660 = vmatpush.msra.mxu0 0.0
        %661 = vmatpush.msra.mxu0 0.0
        %662 = vmatpush.msra.mxu0 0.0
        %663 = vmatpush.msra.mxu0 0.0
        %664 = vmatpush.msra.mxu0 0.0
        %665 = vmatpush.msra.mxu0 0.0
        %666 = vmatpush.msra.mxu0 0.0
        %667 = vmatpush.msra.mxu0 0.0
        %668 = vmatpush.msra.mxu0 0.0
        %669 = vmatpush.msra.mxu0 0.0
        %670 = vmatpush.msra.mxu0 %v568
        %671 = vmatpush.msra.mxu0 %v566
        %672 = vmatmul.f32.gmra.mxu0 %v628
        %v673 = vpop.f32.mrf.mxu0
        %v674 = vadd.f32 %v622, %v673
        %675 = vmatmul.f32.gmra.mxu0 %v631
        %v676 = vpop.f32.mrf.mxu0
        %v677 = vadd.f32 %v625, %v676
        %678 = vdwg.mxu0
        %v679 = vld [vmem:[%s303] sm:$0xff]
        %v680 = vld [vmem:[%s303 + $0x8] sm:$0xff]
        %682 = vset.pattern.permute.xlu0 0
        %683 = vperm.xlu0 %682, %v679
        %v684 = vpop.permute.xlu0 %683
        %687 = vset.pattern.permute.xlu0 0
        %688 = vperm.xlu0 %687, %v680
        %v689 = vpop.permute.xlu0 %688
        %v691 = vadd.f32 %v651, %v684
        %v692 = vadd.f32 %v674, %v684
        %v693 = vadd.f32 %v654, %v689
        %v694 = vadd.f32 %v677, %v689
        %695 = vst [vmem:[#allocation8] sm:$0xff] %v691
        %696 = vst [vmem:[#allocation8 + $0x8] sm:$0xff] %v692
        %697 = vst [vmem:[#allocation8 + $0x10] sm:$0xff] %v693
        %698 = vst [vmem:[#allocation8 + $0x18] sm:$0xff] %v694
        // Predicated region
        $region57: #{tpu_custom_call.1} parent=39 // pred_check
          %p699 = pneg %p152
        $region58: #{tpu_custom_call.1} parent=39 // pred_check_branch
          %701 = sbr.rel (%p699) target = $region60
        $region59: #{tpu_custom_call.1} parent=39 // pred_region
          %703 = vsyncadd [#allocation4], 0
          %s704 = sshll.u32 [#allocation8], 4
          %s705 = int_to_ptr.vmem [resolvable:$true] %s704
          %s706 = sshll.u32 %s5, 4
          %s707 = int_to_ptr.hbm [resolvable:$true] %s706
          %712 = dma.vmem_to_hbm [thread:$0]  %s705, 512, %s707, [#allocation4], 256, 256, 16
        $region60: #{tpu_custom_call.1} parent=39 // pred_fallthru
          _
        // Predicated region
        $region61: #{tpu_custom_call.1} parent=39 // pred_check
          %p713 = pneg %p152
        $region62: #{tpu_custom_call.1} parent=39 // pred_check_branch
          %715 = sbr.rel (%p713) target = $region64
        $region63: #{tpu_custom_call.1} parent=39 // pred_region
          %717 = dma.done [#allocation4], 512
        $region64: #{tpu_custom_call.1} parent=39 // pred_fallthru
          _
      $region40: #{tpu_custom_call.1} parent=5 // pred_fallthru
        _
      %p718 = scmp.le.s32.totalorder 2, %s14
      // Predicated region
      $region65: #{tpu_custom_call.1} parent=5 // pred_check
        %p719 = pneg %p718
      $region66: #{tpu_custom_call.1} parent=5 // pred_check_branch
        %721 = sbr.rel (%p719) target = $region68
      $region67: #{tpu_custom_call.1} parent=5 // pred_region
        %s722 = ssub.s32 %s14, 2
      $region68: #{tpu_custom_call.1} parent=5 // pred_fallthru
        _
    $region6: #{tpu_custom_call.1} parent=1 // loop_footer
      %s18 = sadd.s32 1, %s14
    $region7: #{tpu_custom_call.1} parent=1 // loop_footer_branch
      %13 = sbr.rel target = $region3
    $region8: #{tpu_custom_call.1} parent=1 // loop_exit
      _
    %723 = vsyncpa [#allocation3], 1
    %s724 = scalar_lea.sflag [#allocation3], 1
    %725 = vsyncpa %s724, 1
    %726 = vsyncpa [#allocation6], 1
    %727 = vsyncpa [#allocation4], 1
    %s728 = scalar_lea.sflag [#allocation4], 1
    %729 = vsyncpa %s728, 1

</llo_original>
